<compile_context>
chip_gen: v5e
topology: v5e:2x2
jax: 0.10.0
libtpu: 0.0.40
codegen_flags: <defaults>
</compile_context>

<pallas_src>
import jax
import jax.numpy as jnp
from jax.experimental import pallas as pl
from jax.experimental.pallas import tpu as pltpu


# ----------------------------------------------------------------------------
# Primary path: whole-array HBM -> HBM copy on the DMA engine.
# ----------------------------------------------------------------------------
def _keep_weight_dma_kernel(w_hbm_ref, o_hbm_ref, copy_sem):
    # Pure pass-through: one DMA moves the entire weight without staging it
    # through VMEM (a pure copy has no compute to pipeline against).
    cp = pltpu.make_async_copy(w_hbm_ref, o_hbm_ref, copy_sem)
    cp.start()
    cp.wait()


def keep_weight(weight):
    """KeepWeight.forward(): return the stored weight (fresh buffer, 1 DMA)."""
    nbytes = weight.size * jnp.dtype(weight.dtype).itemsize
    return pl.pallas_call(
        _keep_weight_dma_kernel,
        out_shape=jax.ShapeDtypeStruct(weight.shape, weight.dtype),
        in_specs=[pl.BlockSpec(memory_space=pl.ANY)],
        out_specs=pl.BlockSpec(memory_space=pl.ANY),
        scratch_shapes=[pltpu.SemaphoreType.DMA],
        cost_estimate=pl.CostEstimate(
            flops=0, transcendentals=0, bytes_accessed=2 * nbytes
        ),
    )(weight)


# ----------------------------------------------------------------------------
# Secondary path: BlockSpec-pipelined copy through VMEM (generation-aware).
# ----------------------------------------------------------------------------
def _keep_weight_tiled_kernel(w_ref, o_ref):
    o_ref[...] = w_ref[...]


def _memory_budget():
    """(max_tile_bytes, vmem_limit_cap) derived from the chip's VMEM capacity."""
    vmem_cap = 64 << 20  # conservative default: v7x per-TensorCore VMEM
    try:
        if jax.devices()[0].platform == "tpu":
            vmem_cap = pltpu.get_tpu_info().vmem_capacity_bytes
    except Exception:
        pass
    if vmem_cap >= (128 << 20):
        # v5e / v6e: 128 MiB VMEM -> fewer, larger tiles amortize the
        # ~0.35 us per-grid-step overhead; lift the vmem_limit cap.
        return 16 << 20, 96 << 20
    # v7x: 64 MiB VMEM -> 8 MiB tiles (4x double-buffered + headroom < 48 MiB).
    return 8 << 20, 48 << 20


def _choose_tiles(M, N, itemsize, max_tile_bytes):
    """Pick (tile_m, tile_n): sublane-packed rows, lane-dense 128-mult columns."""
    # Sub-32-bit dtypes pack along sublanes: f32 -> 8, bf16 -> 16, int8 -> 32.
    min_rows = 8 * max(1, 4 // itemsize)
    row_bytes = max(N * itemsize, 1)
    if min_rows * row_bytes <= max_tile_bytes:
        # Full rows fit in budget: tile the row axis only (maximally lane-dense).
        rows = (max_tile_bytes // row_bytes // min_rows) * min_rows
        rows = max(rows, min_rows)
        tile_m = M if (rows >= M or M <= min_rows) else rows
        return tile_m, N
    # Very wide N: also tile the lane axis in 128-column multiples so one packed
    # row-group never exceeds the (double-buffered) VMEM budget.
    tile_m = M if M <= min_rows else min_rows
    cols = (max_tile_bytes // (tile_m * itemsize) // 128) * 128
    cols = max(cols, 128)
    tile_n = N if cols >= N else cols
    return tile_m, tile_n


def keep_weight_tiled(weight, *, max_tile_bytes=None):
    """Copy the weight via large lane-dense VMEM tiles (BlockSpec pipeline)."""
    M, N = weight.shape
    itemsize = jnp.dtype(weight.dtype).itemsize
    default_tile_bytes, vmem_cap = _memory_budget()
    if max_tile_bytes is None:
        max_tile_bytes = default_tile_bytes

    tile_m, tile_n = _choose_tiles(M, N, itemsize, max_tile_bytes)
    grid = (pl.cdiv(M, tile_m), pl.cdiv(N, tile_n))

    tile_bytes = tile_m * tile_n * itemsize
    # in + out, double-buffered, plus headroom; respect the generation cap.
    vmem_limit = min(vmem_cap, max(16 << 20, 4 * tile_bytes + (2 << 20)))

    return pl.pallas_call(
        _keep_weight_tiled_kernel,
        out_shape=jax.ShapeDtypeStruct((M, N), weight.dtype),
        grid=grid,
        in_specs=[pl.BlockSpec((tile_m, tile_n), lambda i, j: (i, j))],
        out_specs=pl.BlockSpec((tile_m, tile_n), lambda i, j: (i, j)),
        compiler_params=pltpu.CompilerParams(
            # TODO(synk): on v7x, use pltpu.CORE_PARALLEL (or pl.core_map over
            # create_tensorcore_mesh) so both TensorCores each copy half the rows.
            dimension_semantics=("parallel", "parallel"),
            vmem_limit_bytes=int(vmem_limit),
        ),
        cost_estimate=pl.CostEstimate(
            flops=0, transcendentals=0, bytes_accessed=2 * M * N * itemsize
        ),
    )(weight)


class KeepWeight:
    """Mirror of the PyTorch module: holds a weight; forward() returns it.

    Note: the truly zero-copy equivalent is `return self.weight` at the JAX
    level (no kernel at all); the Pallas path below materializes a fresh
    buffer with a single HBM->HBM DMA.
    """

    def __init__(self, weight):
        self.weight = weight

    def forward(self):
        return keep_weight(self.weight)


if __name__ == "__main__":
    key = jax.random.PRNGKey(0)
    # Small GPTQ-style linear weight [out_features, in_features].
    weight = jax.random.normal(key, (64, 256), dtype=jnp.float32)

    # Primary (direct-DMA) path via the module wrapper.
    mod = KeepWeight(weight)
    out = jax.block_until_ready(mod.forward())
    assert out.shape == weight.shape and out.dtype == weight.dtype
    assert bool(jnp.array_equal(out, weight))

    # Tiled (BlockSpec-pipelined) path, f32.
    out_t = jax.block_until_ready(keep_weight_tiled(weight))
    assert bool(jnp.array_equal(out_t, weight))

    # Packed dtype (bf16 -> 16-row sublane packing) through both paths.
    w_bf16 = weight.astype(jnp.bfloat16)
    assert bool(jnp.array_equal(jax.block_until_ready(keep_weight(w_bf16)), w_bf16))
    assert bool(jnp.array_equal(jax.block_until_ready(keep_weight_tiled(w_bf16)), w_bf16))

    # Ragged row count with a forced small tile so partial trailing blocks are
    # actually exercised (M=100 not a multiple of the 32-row tile).
    w_ragged = jax.random.normal(jax.random.PRNGKey(1), (100, 384), dtype=jnp.float32)
    out_r = jax.block_until_ready(keep_weight_tiled(w_ragged, max_tile_bytes=48 * 1024))
    assert bool(jnp.array_equal(out_r, w_ragged))
    assert bool(jnp.array_equal(jax.block_until_ready(keep_weight(w_ragged)), w_ragged))

    print("KERNEL_OK")
</pallas_src>

<mosaic_0001>
module attributes {stable_mosaic.version = 11 : i64} {
  func.func @_keep_weight_dma_kernel(%arg0: memref<64x256xf32, #tpu.memory_space<any>>, %arg1: memref<64x256xf32, #tpu.memory_space<any>>, %arg2: memref<!tpu.dma_semaphore, #tpu.memory_space<semaphore_mem>>) attributes {dimension_semantics = [], scalar_prefetch = 0 : i64, scratch_operands = 1 : i64, tpu.core_type = #tpu.core_type<tc>} {
    tpu.enqueue_dma source(%arg0 : memref<64x256xf32, #tpu.memory_space<any>>) target(%arg1 : memref<64x256xf32, #tpu.memory_space<any>>) target_semaphore(%arg2 : memref<!tpu.dma_semaphore, #tpu.memory_space<semaphore_mem>>)
    tpu.wait_dma2 semaphore(%arg2 : memref<!tpu.dma_semaphore, #tpu.memory_space<semaphore_mem>>) src(%arg0 : memref<64x256xf32, #tpu.memory_space<any>>) dst(%arg1 : memref<64x256xf32, #tpu.memory_space<any>>)
    return
  }
}

</mosaic_0001>

<llo_original>
// kernel: tpu_custom_call.1
$region0: #{tpu_custom_call.1}
  #allocation0 [shape = 'u32[]', space=smem, size = 0x4, offset = 0x4, fixed_abs, tag = 'smem constant byte address 0x4 - core index']
  #allocation1 [shape = 'u32[72,128]{1,0:T(1,128)}', space=vmem, size = 0x9000, scoped, tag = 'internal scratch']
  #allocation2 [shape = 's32[1]{0}', space=sflag, size = 0x4, scoped, tag = 'scratch operand']
  #allocation3 [shape = 's32[]', space=sflag, size = 0x4, offset = 0, fixed_abs, tag = 'sflag constant byte address 0x0 - dummy sync flag']
  #allocation4 [shape = 'u32[0]{0}', space=smem, size = 0, offset = 0, fixed_abs, tag = 'smem constant byte address 0x0 - null']
  %s0 = inlined_call_operand.hbm [shape: f32[64,256], index: 0, kind: input, shape index: {}]
  %s1 = inlined_call_operand.hbm [shape: f32[64,256], index: 1, kind: output, shape index: {}]
  %s2 = sld [smem:[#allocation0]]
  $region2: #{tpu_custom_call.1} parent=0
    _
  %s4 = ssub.s32 1, %s2
  %s5 = scalar_select 0, %s4, %s2
  %s7 = sshll.u32 1, 14
  %s8 = sxor.u32 4294967295, %s7
  %s10 = sshll.u32 %s0, 4
  %s11 = int_to_ptr.hbm [resolvable:$true] %s10
  %s12 = sshll.u32 %s1, 4
  %s13 = int_to_ptr.hbm [resolvable:$true] %s12
  %16 = dma.general %s11, 2048, %s13, [#allocation2], [#allocation3], [#allocation4], 0, 0
  %s17 = smul.u32 8, 8
  %s18 = smul.u32 %s17, 2
  %s19 = sshll.u32 %s18, 4
  %20 = dma.done [#allocation2], %s19
  %21 = vsyncmov [#allocation2]
  %s22 = vpop.sfrf %21
  %p23 = scmp.eq.s32.totalorder %s22, 0
  %p24 = pneg %p23
  %26 = shalt.err (%p24)

</llo_original>
